<compile_context>
chip_gen: v5e
topology: v5e:2x2
jax: 0.10.0
libtpu: 0.0.40
codegen_flags: <defaults>
</compile_context>

<pallas_src>
import math
from functools import partial

import jax
import jax.numpy as jnp
from jax.experimental import pallas as pl
from jax.experimental.pallas import tpu as pltpu


_LANE = 128
_MAX_TILE_N = 32768      # 16-32K columns amortizes the ~0.35us per-grid-step overhead
_FLAT_THRESHOLD = 2048   # per-(b,c) slabs below this are folded into one lane slab


def _round_up(n, m):
    return ((n + m - 1) // m) * m


# ----------------------------- Pallas kernels ------------------------------

def _mix_kernel(x_ref, w_ref, o_ref, *, relu_in):
    # x_ref: (Ci, tile_n) f32/bf16, w_ref: (Co, Ci) bf16, o_ref: (Co, tile_n) f32
    x = x_ref[...].astype(jnp.float32)            # ReLU in f32 (v5e VPU has no bf16)
    if relu_in:
        x = jnp.maximum(x, 0.0)
    acc = jnp.dot(w_ref[...], x.astype(jnp.bfloat16),
                  preferred_element_type=jnp.float32)
    o_ref[...] = acc.astype(o_ref.dtype)


def _mix_bias_kernel(x_ref, w_ref, b_ref, o_ref, *, relu_in):
    # b_ref: (Co, 1) f32
    x = x_ref[...].astype(jnp.float32)
    if relu_in:
        x = jnp.maximum(x, 0.0)
    acc = jnp.dot(w_ref[...], x.astype(jnp.bfloat16),
                  preferred_element_type=jnp.float32)
    o_ref[...] = (acc + b_ref[...]).astype(o_ref.dtype)


def _pick_lane_tiling(N, G, max_tile_n):
    """Pad N to 128 only; pick tile_n dividing N_p; guarantee >=2 parallel cells."""
    N_p = _round_up(N, _LANE)
    nb = N_p // _LANE
    max_blocks = max(1, max_tile_n // _LANE)
    best = 1
    d = 1
    while d * d <= nb:
        if nb % d == 0:
            for cand in (d, nb // d):
                if cand <= max_blocks and cand > best:
                    best = cand
        d += 1
    if nb > max_blocks and best * 8 < max_blocks:
        # Pathological factorization (e.g. prime block count): pad up to a clean
        # tile multiple instead of running many tiny steps.
        tile_n = max_blocks * _LANE
        N_p = _round_up(N_p, tile_n)
    else:
        tile_n = best * _LANE
    grid_n = N_p // tile_n
    # v7x megacore: make sure both TensorCores get work when there is enough data.
    if G * grid_n == 1 and N_p >= 2 * _LANE:
        tile_n = _round_up(-(-N_p // 2), _LANE)
        N_p = 2 * tile_n
        grid_n = 2
    return N_p, tile_n, grid_n


def _mix_pallas(x3, w_t, bias=None, relu_in=False, max_tile_n=_MAX_TILE_N):
    """out[g, o, n] = sum_i w_t[o, i] * f(x3[g, i, n]) (+ bias[o]),  f = ReLU if relu_in.

    x3: (G, Ci, N) f32 or bf16; w_t: (Co, Ci).  Channel dims stay unpadded
    (full-extent blocks); the lane axis is padded to 128 and tiled; output is
    f32 with lane-dense stores."""
    G, Ci, N = x3.shape
    Co = w_t.shape[0]
    N_p, tile_n, grid_n = _pick_lane_tiling(N, G, max_tile_n)
    xp = x3 if N_p == N else jnp.pad(x3, ((0, 0), (0, 0), (0, N_p - N)))
    wb = w_t.astype(jnp.bfloat16)
    itemsize = xp.dtype.itemsize

    x_spec = pl.BlockSpec((pl.Squeezed(), Ci, tile_n), lambda g, n: (g, 0, n))
    w_spec = pl.BlockSpec((Co, Ci), lambda g, n: (0, 0))
    o_spec = pl.BlockSpec((pl.Squeezed(), Co, tile_n), lambda g, n: (g, 0, n))
    out_shape = jax.ShapeDtypeStruct((G, Co, N_p), jnp.float32)

    # Double-buffered footprint + small headroom; explicit so big lane tiles fit
    # on v5e (16 MiB scoped default) and stay inside v7x's 64 MiB VMEM.
    vmem_bytes = (2 * (Ci * tile_n * itemsize + Co * tile_n * 4)
                  + 2 * (Co * Ci * 2 + Co * 4) + (2 << 20))
    cp = pltpu.CompilerParams(
        dimension_semantics=("parallel", "parallel"),
        vmem_limit_bytes=int(min(max(vmem_bytes, 32 << 20), 48 << 20)))
    cost = pl.CostEstimate(
        flops=int(2 * G * Co * Ci * N_p), transcendentals=0,
        bytes_accessed=int(G * N_p * (Ci * itemsize + Co * 4) + Co * Ci * 2 + Co * 4))

    if bias is None:
        out = pl.pallas_call(
            partial(_mix_kernel, relu_in=relu_in),
            out_shape=out_shape, grid=(G, grid_n),
            in_specs=[x_spec, w_spec], out_specs=o_spec,
            compiler_params=cp, cost_estimate=cost)(xp, wb)
    else:
        bp = bias.astype(jnp.float32).reshape(Co, 1)
        b_spec = pl.BlockSpec((Co, 1), lambda g, n: (0, 0))
        out = pl.pallas_call(
            partial(_mix_bias_kernel, relu_in=relu_in),
            out_shape=out_shape, grid=(G, grid_n),
            in_specs=[x_spec, w_spec, b_spec], out_specs=o_spec,
            compiler_params=cp, cost_estimate=cost)(xp, wb, bp)
    return out if N_p == N else out[:, :, :N]


def channel_mix(x3, w_t, bias=None, relu_in=False, flat_threshold=_FLAT_THRESHOLD):
    """Batched channel mix on (G, Ci, N).  Large slabs keep the (G, C, n) layout
    (metadata-only reshapes at the call sites); small slabs are folded into one
    dense lane slab (one transpose each way beats many tiny grid steps)."""
    G, Ci, N = x3.shape
    Co = w_t.shape[0]
    if G > 1 and N < flat_threshold:
        # The transpose is a copy anyway -> fuse the bf16 cast into it (halves
        # the kernel's HBM read stream).
        x2 = jnp.transpose(x3, (1, 0, 2)).astype(jnp.bfloat16).reshape(1, Ci, G * N)
        y2 = _mix_pallas(x2, w_t, bias, relu_in)
        return jnp.transpose(y2.reshape(Co, G, N), (1, 0, 2))
    return _mix_pallas(x3, w_t, bias, relu_in)


# --------------------------- wavelet / evenOdd -------------------------------

def wavelet_transform(x, wt_ds, flat_threshold=_FLAT_THRESHOLD):
    """Fused d,s wavelet projection.  wt_ds = [ec_d.T ; ec_s.T], (2*kk, 4*kk)."""
    B, c, ich, Nx, Ny, T = x.shape
    xh, yh = Nx // 2, Ny // 2
    kk = wt_ds.shape[0] // 2
    n_slab = xh * yh * T
    xr = x.reshape(B, c, ich, xh, 2, yh, 2, T)
    if B * c == 1 or n_slab >= flat_threshold:
        # Batched layout: channel index = (2*qx+qy)*ich + i (matches the [ee,eo,oe,oo]
        # concat of the reference); bf16 cast fuses into the quadrant transpose copy.
        xq = jnp.transpose(xr, (0, 1, 4, 6, 2, 3, 5, 7)).astype(jnp.bfloat16)
        y3 = _mix_pallas(xq.reshape(B * c, 4 * ich, n_slab), wt_ds)   # (B*c, 2kk, n)
        y = y3.reshape(B, c, 2 * kk, xh, yh, T)
        return y[:, :, :kk], y[:, :, kk:]                             # d, s
    # Small slabs: fold the whole batch into the lane axis (single dense tile).
    xq = jnp.transpose(xr, (4, 6, 2, 0, 1, 3, 5, 7)).astype(jnp.bfloat16)
    y2 = _mix_pallas(xq.reshape(1, 4 * ich, B * c * n_slab), wt_ds)   # (1, 2kk, N)
    y = y2.reshape(2 * kk, B, c, xh, yh, T)
    d = jnp.transpose(y[:kk], (1, 2, 0, 3, 4, 5))
    s = jnp.transpose(y[kk:], (1, 2, 0, 3, 4, 5))
    return d, s


def even_odd(x, wt_eo, k, flat_threshold=_FLAT_THRESHOLD):
    """Fused 4-way evenOdd projection + quadrant interleave.
    wt_eo = [rc_ee.T ; rc_eo.T ; rc_oe.T ; rc_oo.T], (4*kk, 2*kk)."""
    B, c, ich, Nx, Ny, T = x.shape
    kk = k * k
    assert ich == 2 * kk
    n_slab = Nx * Ny * T
    if B * c == 1 or n_slab >= flat_threshold:
        x3 = x.reshape(B * c, ich, n_slab)                    # metadata-only view
        y3 = _mix_pallas(x3, wt_eo)                           # (B*c, 4kk, n)
        y = y3.reshape(B, c, 2, 2, kk, Nx, Ny, T)             # (B,c,qx,qy,o,nx,ny,t)
        out = jnp.transpose(y, (0, 1, 4, 5, 2, 6, 3, 7))      # (B,c,o,nx,qx,ny,qy,t)
        return out.reshape(B, c, kk, Nx * 2, Ny * 2, T)
    x2 = jnp.transpose(x, (2, 0, 1, 3, 4, 5)).reshape(1, ich, B * c * n_slab)
    y2 = _mix_pallas(x2, wt_eo)                               # (1, 4kk, N)
    y = y2.reshape(2, 2, kk, B, c, Nx, Ny, T)
    out = jnp.transpose(y, (3, 4, 2, 5, 0, 6, 1, 7))
    return out.reshape(B, c, kk, Nx * 2, Ny * 2, T)


# --------------------------- sparseKernelFT ---------------------------------

def _skft_core(x_fft, p, modes, shape):
    """Mode mixing + irfftn + (ReLU + Lo 1x1 conv fused into the Pallas channel mix)."""
    B, c, ich, Nx, Ny, T = shape
    CI = c * ich
    l1 = min(modes, Nx // 2 + 1)
    l2 = min(modes, Ny // 2 + 1)
    l3 = min(modes, T // 2 + 1)

    def cmul(a, w):
        # compl_mul3d: a complex (B,I,x,y,z); w real (I,O,x,y,z,2)
        wr, wi = w[..., 0], w[..., 1]
        op = lambda u, v: jnp.einsum('bixyz,ioxyz->boxyz', u, v)
        real = op(a.real, wr) - op(a.imag, wi)
        imag = op(a.imag, wr) + op(a.real, wi)
        return (real + 1j * imag).astype(jnp.complex64)

    # TODO(synk): the per-mode complex mixing and rfftn/irfftn remain in XLA (no Pallas
    # FFT primitive); corner writes keep the reference order so overlapping rows
    # (modes > Nx//2) resolve identically to torch.
    out_ft = jnp.zeros((B, CI, Nx, Ny, T // 2 + 1), dtype=jnp.complex64)
    out_ft = out_ft.at[:, :, :l1, :l2, :l3].set(
        cmul(x_fft[:, :, :l1, :l2, :l3], p['w1'][:, :, :l1, :l2, :l3]))
    out_ft = out_ft.at[:, :, Nx - l1:, :l2, :l3].set(
        cmul(x_fft[:, :, Nx - l1:, :l2, :l3], p['w2'][:, :, :l1, :l2, :l3]))
    out_ft = out_ft.at[:, :, :l1, Ny - l2:, :l3].set(
        cmul(x_fft[:, :, :l1, Ny - l2:, :l3], p['w3'][:, :, :l1, :l2, :l3]))
    out_ft = out_ft.at[:, :, Nx - l1:, Ny - l2:, :l3].set(
        cmul(x_fft[:, :, Nx - l1:, Ny - l2:, :l3], p['w4'][:, :, :l1, :l2, :l3]))

    xs = jnp.fft.irfftn(out_ft, s=(Nx, Ny, T), axes=(-3, -2, -1)).astype(jnp.float32)
    # F.relu + Conv1d(Lo, kernel_size=1): fused into the Pallas channel mix.
    # (B, CI, n) is a pure view of the irfftn output -> no HBM transpose here.
    y3 = channel_mix(xs.reshape(B, CI, Nx * Ny * T), p['lo_w'], p['lo_b'], relu_in=True)
    return y3.reshape(B, c, ich, Nx, Ny, T)


def sparse_kernel_ft_apply(x, p, modes):
    B, c, ich, Nx, Ny, T = x.shape
    x_fft = jnp.fft.rfftn(x.reshape(B, c * ich, Nx, Ny, T), axes=(-3, -2, -1))
    return _skft_core(x_fft, p, modes, x.shape)


# ------------------------------- MWT_CZ --------------------------------------

def mwt_cz_forward(x, params, *, k, modes, L):
    B, c, ich, Nx, Ny, T = x.shape
    ns = int(math.floor(math.log2(Nx)))
    Ud, Us = [], []
    for _ in range(ns - L):
        d, x = wavelet_transform(x, params['wt_ds'])
        Bc, cc, ic, Nxc, Nyc, Tc = d.shape
        CI = cc * ic
        # Share the rfft of d between the A and C branches.
        d_fft = jnp.fft.rfftn(d.reshape(Bc, CI, Nxc, Nyc, Tc), axes=(-3, -2, -1))
        x_fft = jnp.fft.rfftn(x.reshape(Bc, CI, Nxc, Nyc, Tc), axes=(-3, -2, -1))
        Ud.append(_skft_core(d_fft, params['A'], modes, d.shape)
                  + _skft_core(x_fft, params['B'], modes, d.shape))
        Us.append(_skft_core(d_fft, params['C'], modes, d.shape))

    # T0: 1x1 Conv1d over c*ich channels; (B, c*ich, n) is a pure view.
    y3 = channel_mix(x.reshape(B, c * ich, -1), params['t0_w'], params['t0_b'])
    x = y3.reshape(B, c, ich, 2 ** L, 2 ** L, T)

    for i in range(ns - 1 - L, -1, -1):
        x = x + Us[i]
        # bf16 cast fuses into the concatenate copy -> halves the kernel read stream.
        x = even_odd(jnp.concatenate([x, Ud[i]], axis=2).astype(jnp.bfloat16),
                     params['wt_eo'], k)
    return x


# ------------------------------ parameters -----------------------------------

def init_params(key, k, alpha, c):
    kk = k * k
    ck2 = c * kk
    keys = iter(jax.random.split(key, 40))

    def nrm(shape, scale):
        return (jax.random.normal(next(keys), shape) * scale).astype(jnp.float32)

    # TODO(synk): get_filter('legendre', k) (Legendre quadrature filter bank) is
    # not reproduced; deterministic random (k,k) filters stand in for it.
    H0 = nrm((k, k), 0.5); H1 = nrm((k, k), 0.5)
    G0 = nrm((k, k), 0.5); G1 = nrm((k, k), 0.5)
    PHI0 = nrm((k, k), 0.5); PHI1 = nrm((k, k), 0.5)

    H0r, G0r = H0 @ PHI0, G0 @ PHI0
    H1r, G1r = H1 @ PHI1, G1 @ PHI1
    thr = lambda m: jnp.where(jnp.abs(m) < 1e-8, 0.0, m)
    H0r, H1r, G0r, G1r = thr(H0r), thr(H1r), thr(G0r), thr(G1r)

    ec_s = jnp.concatenate([jnp.kron(H0, H0).T, jnp.kron(H0, H1).T,
                            jnp.kron(H1, H0).T, jnp.kron(H1, H1).T], axis=0)
    ec_d = jnp.concatenate([jnp.kron(G0, G0).T, jnp.kron(G0, G1).T,
                            jnp.kron(G1, G0).T, jnp.kron(G1, G1).T], axis=0)
    rc_ee = jnp.concatenate([jnp.kron(H0r, H0r), jnp.kron(G0r, G0r)], axis=0)
    rc_eo = jnp.concatenate([jnp.kron(H0r, H1r), jnp.kron(G0r, G1r)], axis=0)
    rc_oe = jnp.concatenate([jnp.kron(H1r, H0r), jnp.kron(G1r, G0r)], axis=0)
    rc_oo = jnp.concatenate([jnp.kron(H1r, H1r), jnp.kron(G1r, G1r)], axis=0)

    # Fused, transposed (out, in) weights for the Pallas channel-mix kernel:
    wt_ds = jnp.concatenate([ec_d.T, ec_s.T], axis=0)                        # (2kk, 4kk)
    wt_eo = jnp.concatenate([rc_ee.T, rc_eo.T, rc_oe.T, rc_oo.T], axis=0)    # (4kk, 2kk)

    w_std = math.sqrt(2.0 / (2.0 * ck2 * (alpha ** 3) * 2.0))   # ~xavier_normal
    c_std = 1.0 / math.sqrt(ck2)                                # ~Conv1d default

    def skft():
        return {
            'w1': nrm((ck2, ck2, alpha, alpha, alpha, 2), w_std),
            'w2': nrm((ck2, ck2, alpha, alpha, alpha, 2), w_std),
            'w3': nrm((ck2, ck2, alpha, alpha, alpha, 2), w_std),
            'w4': nrm((ck2, ck2, alpha, alpha, alpha, 2), w_std),
            'lo_w': nrm((ck2, ck2), c_std),   # Conv1d weight (out, in)
            'lo_b': nrm((ck2,), c_std),
        }

    return {
        'wt_ds': wt_ds, 'wt_eo': wt_eo,
        'A': skft(), 'B': skft(), 'C': skft(),
        't0_w': nrm((ck2, ck2), c_std),
        't0_b': nrm((ck2,), c_std),
    }


# --------------------------------- main ---------------------------------------

if __name__ == "__main__":
    k, alpha, L, c = 3, 5, 0, 1
    B, Nx, Ny, T = 2, 8, 8, 4
    ich = k * k

    key = jax.random.PRNGKey(0)
    kx, kp, k1, k2, k3 = jax.random.split(key, 5)
    x = jax.random.normal(kx, (B, c, ich, Nx, Ny, T), dtype=jnp.float32)
    params = init_params(kp, k, alpha, c)

    fwd = jax.jit(partial(mwt_cz_forward, k=k, modes=alpha, L=L))
    out = fwd(x, params)
    jax.block_until_ready(out)
    assert out.shape == (B, c, ich, Nx, Ny, T), out.shape
    assert bool(jnp.all(jnp.isfinite(out)))

    # Also exercise the batched (G, C, n) multi-slab Pallas path and verify it
    # against a plain-JAX reference (bf16 operands, f32 accumulation).
    xb = jax.random.normal(k1, (4, 12, 4096), dtype=jnp.bfloat16)
    wb = jax.random.normal(k2, (10, 12), dtype=jnp.float32)
    bb = jax.random.normal(k3, (10,), dtype=jnp.float32)
    yb = jax.jit(partial(channel_mix, relu_in=True))(xb, wb, bb)
    jax.block_until_ready(yb)
    xr = jnp.maximum(xb.astype(jnp.float32), 0.0).astype(jnp.bfloat16).astype(jnp.float32)
    wr = wb.astype(jnp.bfloat16).astype(jnp.float32)
    ref = jnp.einsum('oi,gin->gon', wr, xr) + bb[None, :, None]
    assert yb.shape == ref.shape
    assert bool(jnp.allclose(yb, ref, rtol=5e-2, atol=5e-2)), \
        float(jnp.max(jnp.abs(yb - ref)))

    print("KERNEL_OK")
</pallas_src>

<mosaic_0001>
module attributes {stable_mosaic.version = 11 : i64} {
  func.func @_mix_kernel(%arg0: i32, %arg1: i32, %arg2: memref<1x36x128xbf16, #tpu.memory_space<vmem>>, %arg3: memref<18x36xbf16, #tpu.memory_space<vmem>>, %arg4: memref<1x18x128xf32, #tpu.memory_space<vmem>>) attributes {dimension_semantics = [#tpu.dimension_semantics<parallel>, #tpu.dimension_semantics<parallel>], iteration_bounds = array<i64: 1, 1>, scalar_prefetch = 0 : i64, scratch_operands = 0 : i64, tpu.core_type = #tpu.core_type<tc>, window_params = [{transform_indices = @transform_0, window_bounds = array<i64: 1, 36, 128>}, {pipeline_mode = #tpu.pipeline_mode<synchronous>, transform_indices = @transform_1, window_bounds = array<i64: 18, 36>}, {transform_indices = @transform_2, window_bounds = array<i64: 1, 18, 128>}]} {
    %c0 = arith.constant 0 : index
    %c0_0 = arith.constant 0 : index
    %c0_1 = arith.constant 0 : index
    %0 = vector.load %arg2[%c0, %c0_0, %c0_1] : memref<1x36x128xbf16, #tpu.memory_space<vmem>>, vector<1x36x128xbf16>
    %1 = vector.shape_cast %0 : vector<1x36x128xbf16> to vector<36x128xbf16>
    %2 = arith.extf %1 : vector<36x128xbf16> to vector<36x128xf32>
    %c0_2 = arith.constant 0 : index
    %c0_3 = arith.constant 0 : index
    %3 = vector.load %arg3[%c0_2, %c0_3] : memref<18x36xbf16, #tpu.memory_space<vmem>>, vector<18x36xbf16>
    %4 = arith.truncf %2 : vector<36x128xf32> to vector<36x128xbf16>
    %cst = arith.constant dense<0.000000e+00> : vector<18x128xf32>
    %5 = tpu.matmul %3, %4, %cst {dimension_numbers = #tpu.dot_dimension_numbers<[1], [0], [0], [1], [0, 0, 1, 1], [], []>} : vector<18x36xbf16>, vector<36x128xbf16>, vector<18x128xf32> -> vector<18x128xf32>
    %c0_4 = arith.constant 0 : index
    %c0_5 = arith.constant 0 : index
    %c0_6 = arith.constant 0 : index
    %6 = vector.load %arg4[%c0_4, %c0_5, %c0_6] : memref<1x18x128xf32, #tpu.memory_space<vmem>>, vector<1x18x128xf32>
    %7 = vector.shape_cast %6 : vector<1x18x128xf32> to vector<18x128xf32>
    %8 = vector.shape_cast %5 : vector<18x128xf32> to vector<1x18x128xf32>
    tpu.vector_store %arg4[%c0_4, %c0_5, %c0_6], %8 {strides = array<i32>} : memref<1x18x128xf32, #tpu.memory_space<vmem>>, vector<1x18x128xf32>,
    return
  }
  func.func @transform_0(%arg0: i32, %arg1: i32) -> (i32, i32, i32) {
    %c0_i32 = arith.constant 0 : i32
    %c0_i32_0 = arith.constant 0 : i32
    return %arg0, %c0_i32, %arg1 : i32, i32, i32
  }
  func.func @transform_1(%arg0: i32, %arg1: i32) -> (i32, i32) {
    %c0_i32 = arith.constant 0 : i32
    %c0_i32_0 = arith.constant 0 : i32
    %c0_i32_1 = arith.constant 0 : i32
    return %c0_i32, %c0_i32_0 : i32, i32
  }
  func.func @transform_2(%arg0: i32, %arg1: i32) -> (i32, i32, i32) {
    %c0_i32 = arith.constant 0 : i32
    %c0_i32_0 = arith.constant 0 : i32
    return %arg0, %c0_i32, %arg1 : i32, i32, i32
  }
}

module attributes {stable_mosaic.version = 11 : i64} {
  func.func @_mix_bias_kernel(%arg0: i32, %arg1: i32, %arg2: memref<1x9x128xbf16, #tpu.memory_space<vmem>>, %arg3: memref<9x9xbf16, #tpu.memory_space<vmem>>, %arg4: memref<9x1xf32, #tpu.memory_space<vmem>>, %arg5: memref<1x9x128xf32, #tpu.memory_space<vmem>>) attributes {dimension_semantics = [#tpu.dimension_semantics<parallel>, #tpu.dimension_semantics<parallel>], iteration_bounds = array<i64: 1, 1>, scalar_prefetch = 0 : i64, scratch_operands = 0 : i64, tpu.core_type = #tpu.core_type<tc>, window_params = [{transform_indices = @transform_0, window_bounds = array<i64: 1, 9, 128>}, {pipeline_mode = #tpu.pipeline_mode<synchronous>, transform_indices = @transform_1, window_bounds = array<i64: 9, 9>}, {pipeline_mode = #tpu.pipeline_mode<synchronous>, transform_indices = @transform_2, window_bounds = array<i64: 9, 1>}, {transform_indices = @transform_3, window_bounds = array<i64: 1, 9, 128>}]} {
    %c0 = arith.constant 0 : index
    %c0_0 = arith.constant 0 : index
    %c0_1 = arith.constant 0 : index
    %0 = vector.load %arg2[%c0, %c0_0, %c0_1] : memref<1x9x128xbf16, #tpu.memory_space<vmem>>, vector<1x9x128xbf16>
    %1 = vector.shape_cast %0 : vector<1x9x128xbf16> to vector<9x128xbf16>
    %2 = arith.extf %1 : vector<9x128xbf16> to vector<9x128xf32>
    %cst = arith.constant 0.000000e+00 : f32
    %3 = vector.broadcast %cst : f32 to vector<9x128xf32>
    %4 = arith.maximumf %2, %3 : vector<9x128xf32>
    %c0_2 = arith.constant 0 : index
    %c0_3 = arith.constant 0 : index
    %5 = vector.load %arg3[%c0_2, %c0_3] : memref<9x9xbf16, #tpu.memory_space<vmem>>, vector<9x9xbf16>
    %6 = arith.truncf %4 : vector<9x128xf32> to vector<9x128xbf16>
    %cst_4 = arith.constant dense<0.000000e+00> : vector<9x128xf32>
    %7 = tpu.matmul %5, %6, %cst_4 {dimension_numbers = #tpu.dot_dimension_numbers<[1], [0], [0], [1], [0, 0, 1, 1], [], []>} : vector<9x9xbf16>, vector<9x128xbf16>, vector<9x128xf32> -> vector<9x128xf32>
    %c0_5 = arith.constant 0 : index
    %c0_6 = arith.constant 0 : index
    %8 = vector.load %arg4[%c0_5, %c0_6] : memref<9x1xf32, #tpu.memory_space<vmem>>, vector<9x1xf32>
    %9 = vector.broadcast %8 : vector<9x1xf32> to vector<9x128xf32>
    %10 = arith.addf %7, %9 : vector<9x128xf32>
    %c0_7 = arith.constant 0 : index
    %c0_8 = arith.constant 0 : index
    %c0_9 = arith.constant 0 : index
    %11 = vector.load %arg5[%c0_7, %c0_8, %c0_9] : memref<1x9x128xf32, #tpu.memory_space<vmem>>, vector<1x9x128xf32>
    %12 = vector.shape_cast %11 : vector<1x9x128xf32> to vector<9x128xf32>
    %13 = vector.shape_cast %10 : vector<9x128xf32> to vector<1x9x128xf32>
    tpu.vector_store %arg5[%c0_7, %c0_8, %c0_9], %13 {strides = array<i32>} : memref<1x9x128xf32, #tpu.memory_space<vmem>>, vector<1x9x128xf32>,
    return
  }
  func.func @transform_0(%arg0: i32, %arg1: i32) -> (i32, i32, i32) {
    %c0_i32 = arith.constant 0 : i32
    %c0_i32_0 = arith.constant 0 : i32
    return %arg0, %c0_i32, %arg1 : i32, i32, i32
  }
  func.func @transform_1(%arg0: i32, %arg1: i32) -> (i32, i32) {
    %c0_i32 = arith.constant 0 : i32
    %c0_i32_0 = arith.constant 0 : i32
    %c0_i32_1 = arith.constant 0 : i32
    return %c0_i32, %c0_i32_0 : i32, i32
  }
  func.func @transform_2(%arg0: i32, %arg1: i32) -> (i32, i32) {
    %c0_i32 = arith.constant 0 : i32
    %c0_i32_0 = arith.constant 0 : i32
    %c0_i32_1 = arith.constant 0 : i32
    return %c0_i32, %c0_i32_0 : i32, i32
  }
  func.func @transform_3(%arg0: i32, %arg1: i32) -> (i32, i32, i32) {
    %c0_i32 = arith.constant 0 : i32
    %c0_i32_0 = arith.constant 0 : i32
    return %arg0, %c0_i32, %arg1 : i32, i32, i32
  }
}

module attributes {stable_mosaic.version = 11 : i64} {
  func.func @_mix_bias_kernel(%arg0: i32, %arg1: i32, %arg2: memref<1x9x128xbf16, #tpu.memory_space<vmem>>, %arg3: memref<9x9xbf16, #tpu.memory_space<vmem>>, %arg4: memref<9x1xf32, #tpu.memory_space<vmem>>, %arg5: memref<1x9x128xf32, #tpu.memory_space<vmem>>) attributes {dimension_semantics = [#tpu.dimension_semantics<parallel>, #tpu.dimension_semantics<parallel>], iteration_bounds = array<i64: 1, 1>, scalar_prefetch = 0 : i64, scratch_operands = 0 : i64, tpu.core_type = #tpu.core_type<tc>, window_params = [{transform_indices = @transform_0, window_bounds = array<i64: 1, 9, 128>}, {pipeline_mode = #tpu.pipeline_mode<synchronous>, transform_indices = @transform_1, window_bounds = array<i64: 9, 9>}, {pipeline_mode = #tpu.pipeline_mode<synchronous>, transform_indices = @transform_2, window_bounds = array<i64: 9, 1>}, {transform_indices = @transform_3, window_bounds = array<i64: 1, 9, 128>}]} {
    %c0 = arith.constant 0 : index
    %c0_0 = arith.constant 0 : index
    %c0_1 = arith.constant 0 : index
    %0 = vector.load %arg2[%c0, %c0_0, %c0_1] : memref<1x9x128xbf16, #tpu.memory_space<vmem>>, vector<1x9x128xbf16>
    %1 = vector.shape_cast %0 : vector<1x9x128xbf16> to vector<9x128xbf16>
    %2 = arith.extf %1 : vector<9x128xbf16> to vector<9x128xf32>
    %c0_2 = arith.constant 0 : index
    %c0_3 = arith.constant 0 : index
    %3 = vector.load %arg3[%c0_2, %c0_3] : memref<9x9xbf16, #tpu.memory_space<vmem>>, vector<9x9xbf16>
    %4 = arith.truncf %2 : vector<9x128xf32> to vector<9x128xbf16>
    %cst = arith.constant dense<0.000000e+00> : vector<9x128xf32>
    %5 = tpu.matmul %3, %4, %cst {dimension_numbers = #tpu.dot_dimension_numbers<[1], [0], [0], [1], [0, 0, 1, 1], [], []>} : vector<9x9xbf16>, vector<9x128xbf16>, vector<9x128xf32> -> vector<9x128xf32>
    %c0_4 = arith.constant 0 : index
    %c0_5 = arith.constant 0 : index
    %6 = vector.load %arg4[%c0_4, %c0_5] : memref<9x1xf32, #tpu.memory_space<vmem>>, vector<9x1xf32>
    %7 = vector.broadcast %6 : vector<9x1xf32> to vector<9x128xf32>
    %8 = arith.addf %5, %7 : vector<9x128xf32>
    %c0_6 = arith.constant 0 : index
    %c0_7 = arith.constant 0 : index
    %c0_8 = arith.constant 0 : index
    %9 = vector.load %arg5[%c0_6, %c0_7, %c0_8] : memref<1x9x128xf32, #tpu.memory_space<vmem>>, vector<1x9x128xf32>
    %10 = vector.shape_cast %9 : vector<1x9x128xf32> to vector<9x128xf32>
    %11 = vector.shape_cast %8 : vector<9x128xf32> to vector<1x9x128xf32>
    tpu.vector_store %arg5[%c0_6, %c0_7, %c0_8], %11 {strides = array<i32>} : memref<1x9x128xf32, #tpu.memory_space<vmem>>, vector<1x9x128xf32>,
    return
  }
  func.func @transform_0(%arg0: i32, %arg1: i32) -> (i32, i32, i32) {
    %c0_i32 = arith.constant 0 : i32
    %c0_i32_0 = arith.constant 0 : i32
    return %arg0, %c0_i32, %arg1 : i32, i32, i32
  }
  func.func @transform_1(%arg0: i32, %arg1: i32) -> (i32, i32) {
    %c0_i32 = arith.constant 0 : i32
    %c0_i32_0 = arith.constant 0 : i32
    %c0_i32_1 = arith.constant 0 : i32
    return %c0_i32, %c0_i32_0 : i32, i32
  }
  func.func @transform_2(%arg0: i32, %arg1: i32) -> (i32, i32) {
    %c0_i32 = arith.constant 0 : i32
    %c0_i32_0 = arith.constant 0 : i32
    %c0_i32_1 = arith.constant 0 : i32
    return %c0_i32, %c0_i32_0 : i32, i32
  }
  func.func @transform_3(%arg0: i32, %arg1: i32) -> (i32, i32, i32) {
    %c0_i32 = arith.constant 0 : i32
    %c0_i32_0 = arith.constant 0 : i32
    return %arg0, %c0_i32, %arg1 : i32, i32, i32
  }
}

module attributes {stable_mosaic.version = 11 : i64} {
  func.func @_mix_kernel(%arg0: i32, %arg1: i32, %arg2: memref<1x18x128xbf16, #tpu.memory_space<vmem>>, %arg3: memref<36x18xbf16, #tpu.memory_space<vmem>>, %arg4: memref<1x36x128xf32, #tpu.memory_space<vmem>>) attributes {dimension_semantics = [#tpu.dimension_semantics<parallel>, #tpu.dimension_semantics<parallel>], iteration_bounds = array<i64: 1, 1>, scalar_prefetch = 0 : i64, scratch_operands = 0 : i64, tpu.core_type = #tpu.core_type<tc>, window_params = [{transform_indices = @transform_0, window_bounds = array<i64: 1, 18, 128>}, {pipeline_mode = #tpu.pipeline_mode<synchronous>, transform_indices = @transform_1, window_bounds = array<i64: 36, 18>}, {transform_indices = @transform_2, window_bounds = array<i64: 1, 36, 128>}]} {
    %c0 = arith.constant 0 : index
    %c0_0 = arith.constant 0 : index
    %c0_1 = arith.constant 0 : index
    %0 = vector.load %arg2[%c0, %c0_0, %c0_1] : memref<1x18x128xbf16, #tpu.memory_space<vmem>>, vector<1x18x128xbf16>
    %1 = vector.shape_cast %0 : vector<1x18x128xbf16> to vector<18x128xbf16>
    %2 = arith.extf %1 : vector<18x128xbf16> to vector<18x128xf32>
    %c0_2 = arith.constant 0 : index
    %c0_3 = arith.constant 0 : index
    %3 = vector.load %arg3[%c0_2, %c0_3] : memref<36x18xbf16, #tpu.memory_space<vmem>>, vector<36x18xbf16>
    %4 = arith.truncf %2 : vector<18x128xf32> to vector<18x128xbf16>
    %cst = arith.constant dense<0.000000e+00> : vector<36x128xf32>
    %5 = tpu.matmul %3, %4, %cst {dimension_numbers = #tpu.dot_dimension_numbers<[1], [0], [0], [1], [0, 0, 1, 1], [], []>} : vector<36x18xbf16>, vector<18x128xbf16>, vector<36x128xf32> -> vector<36x128xf32>
    %c0_4 = arith.constant 0 : index
    %c0_5 = arith.constant 0 : index
    %c0_6 = arith.constant 0 : index
    %6 = vector.load %arg4[%c0_4, %c0_5, %c0_6] : memref<1x36x128xf32, #tpu.memory_space<vmem>>, vector<1x36x128xf32>
    %7 = vector.shape_cast %6 : vector<1x36x128xf32> to vector<36x128xf32>
    %8 = vector.shape_cast %5 : vector<36x128xf32> to vector<1x36x128xf32>
    tpu.vector_store %arg4[%c0_4, %c0_5, %c0_6], %8 {strides = array<i32>} : memref<1x36x128xf32, #tpu.memory_space<vmem>>, vector<1x36x128xf32>,
    return
  }
  func.func @transform_0(%arg0: i32, %arg1: i32) -> (i32, i32, i32) {
    %c0_i32 = arith.constant 0 : i32
    %c0_i32_0 = arith.constant 0 : i32
    return %arg0, %c0_i32, %arg1 : i32, i32, i32
  }
  func.func @transform_1(%arg0: i32, %arg1: i32) -> (i32, i32) {
    %c0_i32 = arith.constant 0 : i32
    %c0_i32_0 = arith.constant 0 : i32
    %c0_i32_1 = arith.constant 0 : i32
    return %c0_i32, %c0_i32_0 : i32, i32
  }
  func.func @transform_2(%arg0: i32, %arg1: i32) -> (i32, i32, i32) {
    %c0_i32 = arith.constant 0 : i32
    %c0_i32_0 = arith.constant 0 : i32
    return %arg0, %c0_i32, %arg1 : i32, i32, i32
  }
}

</mosaic_0001>

<llo_original>
// kernel: mwt_cz_forward.16
$region0: #{mwt_cz_forward.16}
  #allocation0 [shape = 'u32[]', space=smem, size = 0x4, offset = 0x4, fixed_abs, tag = 'smem constant byte address 0x4 - core index']
  #allocation1 [shape = 'u32[72,128]{1,0:T(1,128)}', space=vmem, size = 0x9000, scoped, tag = 'internal scratch']
  %s0 = inlined_call_operand.vmem [shape: bf16[1,36,128], index: 0, kind: input, shape index: {}]
  %s1 = inlined_call_operand.vmem [shape: bf16[18,36], index: 1, kind: input, shape index: {}]
  %s2 = inlined_call_operand.vmem [shape: f32[1,18,128], index: 2, kind: output, shape index: {}]
  %s3 = sld [smem:[#allocation0]]
  $region18: #{mwt_cz_forward.16} parent=0
    _
  %s5 = ssub.s32 1, %s3
  %s6 = scalar_select 0, %s5, %s3
  // Predicated region
  $region2: #{mwt_cz_forward.16} parent=0 // pred_check
    _
  $region3: #{mwt_cz_forward.16} parent=0 // pred_check_branch
    %8 = sbr.rel (0) target = $region5
  $region4: #{mwt_cz_forward.16} parent=0 // pred_region
    _
  $region5: #{mwt_cz_forward.16} parent=0 // pred_fallthru
    _
  // Predicated region
  $region6: #{mwt_cz_forward.16} parent=0 // pred_check
    _
  $region7: #{mwt_cz_forward.16} parent=0 // pred_check_branch
    %10 = sbr.rel (0) target = $region9
  $region8: #{mwt_cz_forward.16} parent=0 // pred_region
    _
  $region9: #{mwt_cz_forward.16} parent=0 // pred_fallthru
    _
  %v12 = vld [vmem:[%s0] sm:$0xf]
  %v13 = vld [vmem:[%s0 + $0x4] sm:$0xf]
  %v14 = vld [vmem:[%s0 + $0x8] sm:$0xf]
  %v15 = vld [vmem:[%s0 + $0xc] sm:$0xf]
  %v16 = vld [vmem:[%s0 + $0x10] sm:$0x3]
  %v17 = vld [vmem:[%s1] sm:$0xf]
  %v18 = vld [vmem:[%s1 + $0x4] sm:$0xf]
  %v19 = vld [vmem:[%s1 + $0x8] sm:$0x1]
  %v23 = vunpack.c.l.b16 %v17
  %v24 = vunpack.c.l.b16 %v18
  %v25 = vunpack.c.l.b16 %v19
  %v26 = vpack.c.b16 %v24, %v23
  %v27 = vpack.c.b16 %v25, %v25
  %v33 = vunpack.c.l.b16 %v12
  %v34 = vunpack.c.l.b16 %v13
  %v35 = vunpack.c.l.b16 %v14
  %v36 = vunpack.c.l.b16 %v15
  %v37 = vunpack.c.l.b16 %v16
  %v38 = vpack.c.b16 %v34, %v33
  %v39 = vpack.c.b16 %v36, %v35
  %v40 = vpack.c.b16 %v37, %v37
  %vm43 = vcmask 293888
  %v45 = vsel %vm43, %v26, 0
  %v48 = vsel %vm43, %v27, 0
  %vm50 = vcmask 1041408
  %v52 = vsel %vm50, %v40, 0
  %54 = vmatpush.bf16.msra.mxu0 0
  %55 = vmatpush.bf16.msra.mxu0 0
  %56 = vmatpush.bf16.msra.mxu0 0
  %57 = vmatpush.bf16.msra.mxu0 0
  %58 = vmatpush.bf16.msra.mxu0 0
  %59 = vmatpush.bf16.msra.mxu0 %v52
  %60 = vmatpush.bf16.msra.mxu0 %v39
  %61 = vmatpush.bf16.msra.mxu0 %v38
  %62 = vmatmul.bf16.gmra.mxu0 %v45
  %v63 = vpop.f32.mrf.mxu0
  %v64 = vadd.f32 0.0, %v63
  %v65 = vpop.f32.mrf.mxu0
  %v66 = vadd.f32 0.0, %v65
  %67 = vmatmul.bf16.gmra.mxu0 %v48
  %v68 = vpop.f32.mrf.mxu0
  %v69 = vadd.f32 0.0, %v68
  %v70 = vpop.f32.mrf.mxu0
  %71 = vdwg.mxu0
  %72 = vst [vmem:[%s2] sm:$0xff] %v64
  %73 = vst [vmem:[%s2 + $0x8] sm:$0xff] %v66
  %74 = vst [vmem:[%s2 + $0x10] sm:$0x3] %v69
  // Predicated region
  $region10: #{mwt_cz_forward.16} parent=0 // pred_check
    _
  $region11: #{mwt_cz_forward.16} parent=0 // pred_check_branch
    %76 = sbr.rel (0) target = $region13
  $region12: #{mwt_cz_forward.16} parent=0 // pred_region
    _
  $region13: #{mwt_cz_forward.16} parent=0 // pred_fallthru
    _
  // Predicated region
  $region14: #{mwt_cz_forward.16} parent=0 // pred_check
    _
  $region15: #{mwt_cz_forward.16} parent=0 // pred_check_branch
    %78 = sbr.rel (0) target = $region17
  $region16: #{mwt_cz_forward.16} parent=0 // pred_region
    _
  $region17: #{mwt_cz_forward.16} parent=0 // pred_fallthru
    _

// kernel: mwt_cz_forward.28
$region0: #{mwt_cz_forward.28}
  #allocation0 [shape = 'u32[]', space=smem, size = 0x4, offset = 0x4, fixed_abs, tag = 'smem constant byte address 0x4 - core index']
  #allocation1 [shape = 'u32[72,128]{1,0:T(1,128)}', space=vmem, size = 0x9000, scoped, tag = 'internal scratch']
  %s0 = inlined_call_operand.vmem [shape: bf16[1,9,128], index: 0, kind: input, shape index: {}]
  %s1 = inlined_call_operand.vmem [shape: bf16[9,9], index: 1, kind: input, shape index: {}]
  %s2 = inlined_call_operand.vmem [shape: f32[9,1], index: 2, kind: input, shape index: {}]
  %s3 = inlined_call_operand.vmem [shape: f32[1,9,128], index: 3, kind: output, shape index: {}]
  %s4 = sld [smem:[#allocation0]]
  $region22: #{mwt_cz_forward.28} parent=0
    _
  %s6 = ssub.s32 1, %s4
  %s7 = scalar_select 0, %s6, %s4
  // Predicated region
  $region2: #{mwt_cz_forward.28} parent=0 // pred_check
    _
  $region3: #{mwt_cz_forward.28} parent=0 // pred_check_branch
    %9 = sbr.rel (0) target = $region5
  $region4: #{mwt_cz_forward.28} parent=0 // pred_region
    _
  $region5: #{mwt_cz_forward.28} parent=0 // pred_fallthru
    _
  // Predicated region
  $region6: #{mwt_cz_forward.28} parent=0 // pred_check
    _
  $region7: #{mwt_cz_forward.28} parent=0 // pred_check_branch
    %11 = sbr.rel (0) target = $region9
  $region8: #{mwt_cz_forward.28} parent=0 // pred_region
    _
  $region9: #{mwt_cz_forward.28} parent=0 // pred_fallthru
    _
  // Predicated region
  $region10: #{mwt_cz_forward.28} parent=0 // pred_check
    _
  $region11: #{mwt_cz_forward.28} parent=0 // pred_check_branch
    %13 = sbr.rel (0) target = $region13
  $region12: #{mwt_cz_forward.28} parent=0 // pred_region
    _
  $region13: #{mwt_cz_forward.28} parent=0 // pred_fallthru
    _
  %v15 = vld [vmem:[%s0] sm:$0xf]
  %v16 = vld [vmem:[%s0 + $0x4] sm:$0x1]
  %v17 = vunpack.c.l.bf16 %v15
  %v18 = vunpack.c.l.bf16 %v16
  %v19 = vmax.f32 %v17, 0.0
  %v20 = vmax.f32 %v18, 0.0
  %v21 = vld [vmem:[%s1] sm:$0xf]
  %v22 = vld [vmem:[%s1 + $0x4] sm:$0x1]
  %v23 = vpack.c.bf16 %v20, %v19
  %v24 = vld [vmem:[%s2] sm:$0xff]
  %v25 = vld [vmem:[%s2 + $0x8] sm:$0x1]
  %27 = vset.pattern.permute.xlu0 0
  %28 = vperm.xlu0 %27, %v24
  %v29 = vpop.permute.xlu0 %28
  %32 = vset.pattern.permute.xlu0 0
  %33 = vperm.xlu0 %32, %v25
  %v34 = vpop.permute.xlu0 %33
  %v38 = vunpack.c.l.b16 %v21
  %v39 = vunpack.c.l.b16 %v22
  %v40 = vpack.c.b16 %v39, %v38
  %vm41 = vcmask 72704
  %v43 = vsel %vm41, %v40, 0
  %vm45 = vcmask 1043456
  %vm46 = vcmask 1044480
  %v47 = vsel %vm45, 4294967295, 65535
  %v48 = vsel %vm46, %v47, 0
  %v50 = vand.u32 %v23, %v48
  %52 = vmatpush.bf16.msra.mxu0 0
  %53 = vmatpush.bf16.msra.mxu0 0
  %54 = vmatpush.bf16.msra.mxu0 0
  %55 = vmatpush.bf16.msra.mxu0 0
  %56 = vmatpush.bf16.msra.mxu0 0
  %57 = vmatpush.bf16.msra.mxu0 0
  %58 = vmatpush.bf16.msra.mxu0 0
  %59 = vmatpush.bf16.msra.mxu0 %v50
  %60 = vmatmul.bf16.gmra.mxu0 %v43
  %v61 = vpop.f32.mrf.mxu0
  %v62 = vadd.f32 %v29, %v61
  %v63 = vpop.f32.mrf.mxu0
  %v64 = vadd.f32 %v34, %v63
  %65 = vdwg.mxu0
  %66 = vst [vmem:[%s3] sm:$0xff] %v62
  %67 = vst [vmem:[%s3 + $0x8] sm:$0x1] %v64
  // Predicated region
  $region14: #{mwt_cz_forward.28} parent=0 // pred_check
    _
  $region15: #{mwt_cz_forward.28} parent=0 // pred_check_branch
    %69 = sbr.rel (0) target = $region17
  $region16: #{mwt_cz_forward.28} parent=0 // pred_region
    _
  $region17: #{mwt_cz_forward.28} parent=0 // pred_fallthru
    _
  // Predicated region
  $region18: #{mwt_cz_forward.28} parent=0 // pred_check
    _
  $region19: #{mwt_cz_forward.28} parent=0 // pred_check_branch
    %71 = sbr.rel (0) target = $region21
  $region20: #{mwt_cz_forward.28} parent=0 // pred_region
    _
  $region21: #{mwt_cz_forward.28} parent=0 // pred_fallthru
    _

// kernel: mwt_cz_forward.19
$region0: #{mwt_cz_forward.19}
  #allocation0 [shape = 'u32[]', space=smem, size = 0x4, offset = 0x4, fixed_abs, tag = 'smem constant byte address 0x4 - core index']
  #allocation1 [shape = 'u32[72,128]{1,0:T(1,128)}', space=vmem, size = 0x9000, scoped, tag = 'internal scratch']
  %s0 = inlined_call_operand.vmem [shape: bf16[1,9,128], index: 0, kind: input, shape index: {}]
  %s1 = inlined_call_operand.vmem [shape: bf16[9,9], index: 1, kind: input, shape index: {}]
  %s2 = inlined_call_operand.vmem [shape: f32[9,1], index: 2, kind: input, shape index: {}]
  %s3 = inlined_call_operand.vmem [shape: f32[1,9,128], index: 3, kind: output, shape index: {}]
  %s4 = sld [smem:[#allocation0]]
  $region22: #{mwt_cz_forward.19} parent=0
    _
  %s6 = ssub.s32 1, %s4
  %s7 = scalar_select 0, %s6, %s4
  // Predicated region
  $region2: #{mwt_cz_forward.19} parent=0 // pred_check
    _
  $region3: #{mwt_cz_forward.19} parent=0 // pred_check_branch
    %9 = sbr.rel (0) target = $region5
  $region4: #{mwt_cz_forward.19} parent=0 // pred_region
    _
  $region5: #{mwt_cz_forward.19} parent=0 // pred_fallthru
    _
  // Predicated region
  $region6: #{mwt_cz_forward.19} parent=0 // pred_check
    _
  $region7: #{mwt_cz_forward.19} parent=0 // pred_check_branch
    %11 = sbr.rel (0) target = $region9
  $region8: #{mwt_cz_forward.19} parent=0 // pred_region
    _
  $region9: #{mwt_cz_forward.19} parent=0 // pred_fallthru
    _
  // Predicated region
  $region10: #{mwt_cz_forward.19} parent=0 // pred_check
    _
  $region11: #{mwt_cz_forward.19} parent=0 // pred_check_branch
    %13 = sbr.rel (0) target = $region13
  $region12: #{mwt_cz_forward.19} parent=0 // pred_region
    _
  $region13: #{mwt_cz_forward.19} parent=0 // pred_fallthru
    _
  %v15 = vld [vmem:[%s0] sm:$0xf]
  %v16 = vld [vmem:[%s0 + $0x4] sm:$0x1]
  %v17 = vld [vmem:[%s1] sm:$0xf]
  %v18 = vld [vmem:[%s1 + $0x4] sm:$0x1]
  %v19 = vld [vmem:[%s2] sm:$0xff]
  %v20 = vld [vmem:[%s2 + $0x8] sm:$0x1]
  %22 = vset.pattern.permute.xlu0 0
  %23 = vperm.xlu0 %22, %v19
  %v24 = vpop.permute.xlu0 %23
  %27 = vset.pattern.permute.xlu0 0
  %28 = vperm.xlu0 %27, %v20
  %v29 = vpop.permute.xlu0 %28
  %v33 = vunpack.c.l.b16 %v17
  %v34 = vunpack.c.l.b16 %v18
  %v35 = vpack.c.b16 %v34, %v33
  %v38 = vunpack.c.l.b16 %v15
  %v39 = vunpack.c.l.b16 %v16
  %v40 = vpack.c.b16 %v39, %v38
  %vm41 = vcmask 72704
  %v43 = vsel %vm41, %v35, 0
  %vm45 = vcmask 1043456
  %vm46 = vcmask 1044480
  %v47 = vsel %vm45, 4294967295, 65535
  %v48 = vsel %vm46, %v47, 0
  %v50 = vand.u32 %v40, %v48
  %52 = vmatpush.bf16.msra.mxu0 0
  %53 = vmatpush.bf16.msra.mxu0 0
  %54 = vmatpush.bf16.msra.mxu0 0
  %55 = vmatpush.bf16.msra.mxu0 0
  %56 = vmatpush.bf16.msra.mxu0 0
  %57 = vmatpush.bf16.msra.mxu0 0
  %58 = vmatpush.bf16.msra.mxu0 0
  %59 = vmatpush.bf16.msra.mxu0 %v50
  %60 = vmatmul.bf16.gmra.mxu0 %v43
  %v61 = vpop.f32.mrf.mxu0
  %v62 = vadd.f32 %v24, %v61
  %v63 = vpop.f32.mrf.mxu0
  %v64 = vadd.f32 %v29, %v63
  %65 = vdwg.mxu0
  %66 = vst [vmem:[%s3] sm:$0xff] %v62
  %67 = vst [vmem:[%s3 + $0x8] sm:$0x1] %v64
  // Predicated region
  $region14: #{mwt_cz_forward.19} parent=0 // pred_check
    _
  $region15: #{mwt_cz_forward.19} parent=0 // pred_check_branch
    %69 = sbr.rel (0) target = $region17
  $region16: #{mwt_cz_forward.19} parent=0 // pred_region
    _
  $region17: #{mwt_cz_forward.19} parent=0 // pred_fallthru
    _
  // Predicated region
  $region18: #{mwt_cz_forward.19} parent=0 // pred_check
    _
  $region19: #{mwt_cz_forward.19} parent=0 // pred_check_branch
    %71 = sbr.rel (0) target = $region21
  $region20: #{mwt_cz_forward.19} parent=0 // pred_region
    _
  $region21: #{mwt_cz_forward.19} parent=0 // pred_fallthru
    _

// kernel: mwt_cz_forward.23
$region0: #{mwt_cz_forward.23}
  #allocation0 [shape = 'u32[]', space=smem, size = 0x4, offset = 0x4, fixed_abs, tag = 'smem constant byte address 0x4 - core index']
  #allocation1 [shape = 'u32[72,128]{1,0:T(1,128)}', space=vmem, size = 0x9000, scoped, tag = 'internal scratch']
  %s0 = inlined_call_operand.vmem [shape: bf16[1,18,128], index: 0, kind: input, shape index: {}]
  %s1 = inlined_call_operand.vmem [shape: bf16[36,18], index: 1, kind: input, shape index: {}]
  %s2 = inlined_call_operand.vmem [shape: f32[1,36,128], index: 2, kind: output, shape index: {}]
  %s3 = sld [smem:[#allocation0]]
  $region18: #{mwt_cz_forward.23} parent=0
    _
  %s5 = ssub.s32 1, %s3
  %s6 = scalar_select 0, %s5, %s3
  // Predicated region
  $region2: #{mwt_cz_forward.23} parent=0 // pred_check
    _
  $region3: #{mwt_cz_forward.23} parent=0 // pred_check_branch
    %8 = sbr.rel (0) target = $region5
  $region4: #{mwt_cz_forward.23} parent=0 // pred_region
    _
  $region5: #{mwt_cz_forward.23} parent=0 // pred_fallthru
    _
  // Predicated region
  $region6: #{mwt_cz_forward.23} parent=0 // pred_check
    _
  $region7: #{mwt_cz_forward.23} parent=0 // pred_check_branch
    %10 = sbr.rel (0) target = $region9
  $region8: #{mwt_cz_forward.23} parent=0 // pred_region
    _
  $region9: #{mwt_cz_forward.23} parent=0 // pred_fallthru
    _
  %v12 = vld [vmem:[%s0] sm:$0xf]
  %v13 = vld [vmem:[%s0 + $0x4] sm:$0xf]
  %v14 = vld [vmem:[%s0 + $0x8] sm:$0x1]
  %v15 = vld [vmem:[%s1] sm:$0xf]
  %v16 = vld [vmem:[%s1 + $0x4] sm:$0xf]
  %v17 = vld [vmem:[%s1 + $0x8] sm:$0xf]
  %v18 = vld [vmem:[%s1 + $0xc] sm:$0xf]
  %v19 = vld [vmem:[%s1 + $0x10] sm:$0x3]
  %v25 = vunpack.c.l.b16 %v15
  %v26 = vunpack.c.l.b16 %v16
  %v27 = vunpack.c.l.b16 %v17
  %v28 = vunpack.c.l.b16 %v18
  %v29 = vunpack.c.l.b16 %v19
  %v30 = vpack.c.b16 %v26, %v25
  %v31 = vpack.c.b16 %v28, %v27
  %v32 = vpack.c.b16 %v29, %v29
  %v36 = vunpack.c.l.b16 %v12
  %v37 = vunpack.c.l.b16 %v13
  %v38 = vunpack.c.l.b16 %v14
  %v39 = vpack.c.b16 %v37, %v36
  %v40 = vpack.c.b16 %v38, %v38
  %vm42 = vcmask 146432
  %v44 = vsel %vm42, %v30, 0
  %v47 = vsel %vm42, %v31, 0
  %v50 = vsel %vm42, %v32, 0
  %vm52 = vcmask 1040384
  %v54 = vsel %vm52, %v40, 0
  %56 = vmatpush.bf16.msra.mxu0 0
  %57 = vmatpush.bf16.msra.mxu0 0
  %58 = vmatpush.bf16.msra.mxu0 0
  %59 = vmatpush.bf16.msra.mxu0 0
  %60 = vmatpush.bf16.msra.mxu0 0
  %61 = vmatpush.bf16.msra.mxu0 0
  %62 = vmatpush.bf16.msra.mxu0 %v54
  %63 = vmatpush.bf16.msra.mxu0 %v39
  %64 = vmatmul.bf16.gmra.mxu0 %v44
  %v65 = vpop.f32.mrf.mxu0
  %v66 = vadd.f32 0.0, %v65
  %v67 = vpop.f32.mrf.mxu0
  %v68 = vadd.f32 0.0, %v67
  %69 = vmatmul.bf16.gmra.mxu0 %v47
  %v70 = vpop.f32.mrf.mxu0
  %v71 = vadd.f32 0.0, %v70
  %v72 = vpop.f32.mrf.mxu0
  %v73 = vadd.f32 0.0, %v72
  %74 = vmatmul.bf16.gmra.mxu0 %v50
  %v75 = vpop.f32.mrf.mxu0
  %v76 = vadd.f32 0.0, %v75
  %v77 = vpop.f32.mrf.mxu0
  %78 = vdwg.mxu0
  %79 = vst [vmem:[%s2] sm:$0xff] %v66
  %80 = vst [vmem:[%s2 + $0x8] sm:$0xff] %v68
  %81 = vst [vmem:[%s2 + $0x10] sm:$0xff] %v71
  %82 = vst [vmem:[%s2 + $0x18] sm:$0xff] %v73
  %83 = vst [vmem:[%s2 + $0x20] sm:$0xf] %v76
  // Predicated region
  $region10: #{mwt_cz_forward.23} parent=0 // pred_check
    _
  $region11: #{mwt_cz_forward.23} parent=0 // pred_check_branch
    %85 = sbr.rel (0) target = $region13
  $region12: #{mwt_cz_forward.23} parent=0 // pred_region
    _
  $region13: #{mwt_cz_forward.23} parent=0 // pred_fallthru
    _
  // Predicated region
  $region14: #{mwt_cz_forward.23} parent=0 // pred_check
    _
  $region15: #{mwt_cz_forward.23} parent=0 // pred_check_branch
    %87 = sbr.rel (0) target = $region17
  $region16: #{mwt_cz_forward.23} parent=0 // pred_region
    _
  $region17: #{mwt_cz_forward.23} parent=0 // pred_fallthru
    _

</llo_original>
